<compile_context>
chip_gen: v7x
topology: tpu7x:2x2x1
jax: 0.10.0
libtpu: 0.0.40
codegen_flags: <defaults>
</compile_context>

<pallas_src>
import jax
import jax.numpy as jnp
from jax.experimental import pallas as pl
from jax.experimental.pallas import tpu as pltpu


def _round_up(x, m):
    return (x + m - 1) // m * m


def _mlc_kernel(x_ref, w1_ref, b1_ref, w2_ref, b2_ref, o_ref, acc_ref):
    k = pl.program_id(1)

    @pl.when(k == 0)
    def _init():
        acc_ref[...] = jnp.zeros_like(acc_ref)

    # Hidden-layer partial matmul on the MXU (bf16 x bf16 -> f32 accumulate).
    acc_ref[...] += jnp.dot(x_ref[...], w1_ref[...],
                            preferred_element_type=jnp.float32)

    @pl.when(k == pl.num_programs(1) - 1)
    def _epilogue():
        # f32 epilogue (bias + relu), then second MXU matmul in bf16.
        h = jnp.maximum(acc_ref[...] + b1_ref[...], 0.0)
        z = jnp.dot(h.astype(w2_ref.dtype), w2_ref[...],
                    preferred_element_type=jnp.float32)
        z = z + b2_ref[...]
        # sigmoid(z) = 1 / (1 + exp(-z)); exp + approx reciprocal both land on the EUP.
        o_ref[...] = pl.reciprocal(1.0 + jnp.exp(-z), approx=True).astype(o_ref.dtype)


def two_linear_mlc(doc_rep, w1, b1, w2, b2):
    """Forward pass of TwoLinearMLC.

    doc_rep: (batch, *feature_dims)  -> flattened to (batch, input_size)
    w1: (input_size, hidden_size), b1: (hidden_size,)
    w2: (hidden_size, label_size), b2: (label_size,)
    returns: (batch, label_size) float32 in [0, 1]
    """
    batch = doc_rep.shape[0]
    x = doc_rep.reshape(batch, -1)
    input_size = x.shape[1]
    hidden_size = w1.shape[1]
    label_size = w2.shape[1]

    # ---- padded / tiled sizes -------------------------------------------------
    h_pad = _round_up(hidden_size, 128)          # lane-dense hidden
    l_pad = _round_up(label_size, 128)           # lane-dense output
    tm = min(128, _round_up(batch, 16))          # sublane-aligned batch tile
    m_pad = _round_up(batch, tm)
    tk = min(512, _round_up(input_size, 128))    # K tile: fits 2x-buffered on v7x 64MiB
    k_pad = _round_up(input_size, tk)

    # ---- bf16 operands (zero-padded), f32 biases ------------------------------
    x_p = jnp.zeros((m_pad, k_pad), jnp.bfloat16).at[:batch, :input_size].set(
        x.astype(jnp.bfloat16))
    w1_p = jnp.zeros((k_pad, h_pad), jnp.bfloat16).at[:input_size, :hidden_size].set(
        w1.astype(jnp.bfloat16))
    w2_p = jnp.zeros((h_pad, l_pad), jnp.bfloat16).at[:hidden_size, :label_size].set(
        w2.astype(jnp.bfloat16))
    b1_p = jnp.zeros((1, h_pad), jnp.float32).at[0, :hidden_size].set(
        b1.astype(jnp.float32))
    b2_p = jnp.zeros((1, l_pad), jnp.float32).at[0, :label_size].set(
        b2.astype(jnp.float32))

    grid = (m_pad // tm, k_pad // tk)

    flops = 2 * batch * (input_size * hidden_size + hidden_size * label_size)
    bytes_accessed = ((x_p.size + w1_p.size + w2_p.size) * 2
                      + (b1_p.size + b2_p.size + m_pad * l_pad) * 4)

    out = pl.pallas_call(
        _mlc_kernel,
        out_shape=jax.ShapeDtypeStruct((m_pad, l_pad), jnp.float32),
        grid_spec=pltpu.PrefetchScalarGridSpec(
            num_scalar_prefetch=0,
            grid=grid,
            in_specs=[
                pl.BlockSpec((tm, tk), lambda i, k: (i, k)),        # x tile
                pl.BlockSpec((tk, h_pad), lambda i, k: (k, 0)),     # W1 K-slice
                pl.BlockSpec((1, h_pad), lambda i, k: (0, 0)),      # b1 (resident)
                pl.BlockSpec((h_pad, l_pad), lambda i, k: (0, 0)),  # W2 (resident)
                pl.BlockSpec((1, l_pad), lambda i, k: (0, 0)),      # b2 (resident)
            ],
            out_specs=pl.BlockSpec((tm, l_pad), lambda i, k: (i, 0)),
            scratch_shapes=[pltpu.VMEM((tm, h_pad), jnp.float32)],
        ),
        compiler_params=pltpu.CompilerParams(
            dimension_semantics=("parallel", "arbitrary"),
            vmem_limit_bytes=48 * 1024 * 1024,
        ),
        cost_estimate=pl.CostEstimate(
            flops=flops,
            transcendentals=batch * label_size,
            bytes_accessed=bytes_accessed,
        ),
    )(x_p, w1_p, b1_p, w2_p, b2_p)

    # Slice away batch / label padding (padded label cols hold sigmoid(0)=0.5 garbage).
    return out[:batch, :label_size]


def init_params(key, input_size, hidden_size, label_size):
    """Deterministic init mimicking torch.nn.Linear's U(-1/sqrt(fan_in), 1/sqrt(fan_in))."""
    k1, k2, k3, k4 = jax.random.split(key, 4)
    lim1 = 1.0 / jnp.sqrt(jnp.float32(input_size))
    lim2 = 1.0 / jnp.sqrt(jnp.float32(hidden_size))
    w1 = jax.random.uniform(k1, (input_size, hidden_size), jnp.float32, -lim1, lim1)
    b1 = jax.random.uniform(k2, (hidden_size,), jnp.float32, -lim1, lim1)
    w2 = jax.random.uniform(k3, (hidden_size, label_size), jnp.float32, -lim2, lim2)
    b2 = jax.random.uniform(k4, (label_size,), jnp.float32, -lim2, lim2)
    return w1, b1, w2, b2


if __name__ == "__main__":
    key = jax.random.PRNGKey(0)
    k_in, k_par = jax.random.split(key)

    # Small shapes consistent with the module: doc_rep (batch, 4, 16) -> input_size = 64
    batch, hidden_size, label_size = 2, 32, 16
    doc_rep = jax.random.normal(k_in, (batch, 4, 16), jnp.float32)
    input_size = 4 * 16

    w1, b1, w2, b2 = init_params(k_par, input_size, hidden_size, label_size)

    out = jax.block_until_ready(two_linear_mlc(doc_rep, w1, b1, w2, b2))

    # Reference with the same bf16 quantization of x/W1/W2/h (f32 accumulation),
    # so the comparison stays tight while matching the kernel's dtype choices.
    x_flat = doc_rep.reshape(batch, -1)
    xq = x_flat.astype(jnp.bfloat16).astype(jnp.float32)
    w1q = w1.astype(jnp.bfloat16).astype(jnp.float32)
    w2q = w2.astype(jnp.bfloat16).astype(jnp.float32)
    h_ref = jnp.maximum(xq @ w1q + b1, 0.0)
    hq = h_ref.astype(jnp.bfloat16).astype(jnp.float32)
    ref = jax.nn.sigmoid(hq @ w2q + b2)

    assert out.shape == (batch, label_size)
    assert jnp.allclose(out, ref, atol=5e-3, rtol=5e-3), float(jnp.max(jnp.abs(out - ref)))

    print("KERNEL_OK")
</pallas_src>

<mosaic_0001>
module attributes {stable_mosaic.version = 11 : i64} {
  func.func @_mlc_kernel(%arg0: i32, %arg1: i32, %arg2: memref<16x128xbf16, #tpu.memory_space<vmem>>, %arg3: memref<128x128xbf16, #tpu.memory_space<vmem>>, %arg4: memref<1x128xf32, #tpu.memory_space<vmem>>, %arg5: memref<128x128xbf16, #tpu.memory_space<vmem>>, %arg6: memref<1x128xf32, #tpu.memory_space<vmem>>, %arg7: memref<16x128xf32, #tpu.memory_space<vmem>>, %arg8: memref<16x128xf32, #tpu.memory_space<vmem>>) attributes {dimension_semantics = [#tpu.dimension_semantics<parallel>, #tpu.dimension_semantics<arbitrary>], iteration_bounds = array<i64: 1, 1>, scalar_prefetch = 0 : i64, scratch_operands = 1 : i64, tpu.core_type = #tpu.core_type<tc>, window_params = [{transform_indices = @transform_0, window_bounds = array<i64: 16, 128>}, {transform_indices = @transform_1, window_bounds = array<i64: 128, 128>}, {pipeline_mode = #tpu.pipeline_mode<synchronous>, transform_indices = @transform_2, window_bounds = array<i64: 1, 128>}, {pipeline_mode = #tpu.pipeline_mode<synchronous>, transform_indices = @transform_3, window_bounds = array<i64: 128, 128>}, {pipeline_mode = #tpu.pipeline_mode<synchronous>, transform_indices = @transform_4, window_bounds = array<i64: 1, 128>}, {transform_indices = @transform_5, window_bounds = array<i64: 16, 128>}]} {
    %c0_i32 = arith.constant 0 : i32
    %0 = arith.cmpi eq, %arg1, %c0_i32 : i32
    %1 = arith.extui %0 : i1 to i32
    %c0_i32_0 = arith.constant 0 : i32
    %2 = arith.cmpi ne, %1, %c0_i32_0 : i32
    scf.if %2 {
      %cst_10 = arith.constant 0.000000e+00 : f32
      %12 = vector.broadcast %cst_10 : f32 to vector<16x128xf32>
      %c0_11 = arith.constant 0 : index
      %c0_12 = arith.constant 0 : index
      %13 = vector.load %arg8[%c0_11, %c0_12] : memref<16x128xf32, #tpu.memory_space<vmem>>, vector<16x128xf32>
      tpu.vector_store %arg8[%c0_11, %c0_12], %12 {strides = array<i32>} : memref<16x128xf32, #tpu.memory_space<vmem>>, vector<16x128xf32>,
    } else {
    }
    %c0 = arith.constant 0 : index
    %c0_1 = arith.constant 0 : index
    %3 = vector.load %arg8[%c0, %c0_1] : memref<16x128xf32, #tpu.memory_space<vmem>>, vector<16x128xf32>
    %c0_2 = arith.constant 0 : index
    %c0_3 = arith.constant 0 : index
    %4 = vector.load %arg2[%c0_2, %c0_3] : memref<16x128xbf16, #tpu.memory_space<vmem>>, vector<16x128xbf16>
    %c0_4 = arith.constant 0 : index
    %c0_5 = arith.constant 0 : index
    %5 = vector.load %arg3[%c0_4, %c0_5] : memref<128x128xbf16, #tpu.memory_space<vmem>>, vector<128x128xbf16>
    %cst = arith.constant dense<0.000000e+00> : vector<16x128xf32>
    %6 = tpu.matmul %4, %5, %cst {dimension_numbers = #tpu.dot_dimension_numbers<[1], [0], [0], [1], [0, 0, 1, 1], [], []>} : vector<16x128xbf16>, vector<128x128xbf16>, vector<16x128xf32> -> vector<16x128xf32>
    %7 = arith.addf %3, %6 : vector<16x128xf32>
    %c0_6 = arith.constant 0 : index
    %c0_7 = arith.constant 0 : index
    %8 = vector.load %arg8[%c0_6, %c0_7] : memref<16x128xf32, #tpu.memory_space<vmem>>, vector<16x128xf32>
    tpu.vector_store %arg8[%c0_6, %c0_7], %7 {strides = array<i32>} : memref<16x128xf32, #tpu.memory_space<vmem>>, vector<16x128xf32>,
    %c0_i32_8 = arith.constant 0 : i32
    %9 = arith.cmpi eq, %arg1, %c0_i32_8 : i32
    %10 = arith.extui %9 : i1 to i32
    %c0_i32_9 = arith.constant 0 : i32
    %11 = arith.cmpi ne, %10, %c0_i32_9 : i32
    scf.if %11 {
      %c0_10 = arith.constant 0 : index
      %c0_11 = arith.constant 0 : index
      %12 = vector.load %arg8[%c0_10, %c0_11] : memref<16x128xf32, #tpu.memory_space<vmem>>, vector<16x128xf32>
      %c0_12 = arith.constant 0 : index
      %c0_13 = arith.constant 0 : index
      %13 = vector.load %arg4[%c0_12, %c0_13] : memref<1x128xf32, #tpu.memory_space<vmem>>, vector<1x128xf32>
      %14 = vector.broadcast %13 : vector<1x128xf32> to vector<16x128xf32>
      %15 = arith.addf %12, %14 : vector<16x128xf32>
      %cst_14 = arith.constant 0.000000e+00 : f32
      %16 = vector.broadcast %cst_14 : f32 to vector<16x128xf32>
      %17 = arith.maximumf %15, %16 : vector<16x128xf32>
      %18 = arith.truncf %17 : vector<16x128xf32> to vector<16x128xbf16>
      %c0_15 = arith.constant 0 : index
      %c0_16 = arith.constant 0 : index
      %19 = vector.load %arg5[%c0_15, %c0_16] : memref<128x128xbf16, #tpu.memory_space<vmem>>, vector<128x128xbf16>
      %cst_17 = arith.constant dense<0.000000e+00> : vector<16x128xf32>
      %20 = tpu.matmul %18, %19, %cst_17 {dimension_numbers = #tpu.dot_dimension_numbers<[1], [0], [0], [1], [0, 0, 1, 1], [], []>} : vector<16x128xbf16>, vector<128x128xbf16>, vector<16x128xf32> -> vector<16x128xf32>
      %c0_18 = arith.constant 0 : index
      %c0_19 = arith.constant 0 : index
      %21 = vector.load %arg6[%c0_18, %c0_19] : memref<1x128xf32, #tpu.memory_space<vmem>>, vector<1x128xf32>
      %22 = vector.broadcast %21 : vector<1x128xf32> to vector<16x128xf32>
      %23 = arith.addf %20, %22 : vector<16x128xf32>
      %cst_20 = arith.constant 0.000000e+00 : f32
      %24 = vector.broadcast %cst_20 : f32 to vector<16x128xf32>
      %25 = arith.subf %24, %23 : vector<16x128xf32>
      %26 = math.exp %25 : vector<16x128xf32>
      %cst_21 = arith.constant 1.000000e+00 : f32
      %27 = vector.broadcast %cst_21 : f32 to vector<16x128xf32>
      %28 = arith.addf %27, %26 : vector<16x128xf32>
      %29 = tpu.reciprocal %28 {approx = true} : vector<16x128xf32> -> vector<16x128xf32>
      %c0_22 = arith.constant 0 : index
      %c0_23 = arith.constant 0 : index
      %30 = vector.load %arg7[%c0_22, %c0_23] : memref<16x128xf32, #tpu.memory_space<vmem>>, vector<16x128xf32>
      tpu.vector_store %arg7[%c0_22, %c0_23], %29 {strides = array<i32>} : memref<16x128xf32, #tpu.memory_space<vmem>>, vector<16x128xf32>,
    } else {
    }
    return
  }
  func.func @transform_0(%arg0: i32, %arg1: i32) -> (i32, i32) {
    %c0_i32 = arith.constant 0 : i32
    return %arg0, %arg1 : i32, i32
  }
  func.func @transform_1(%arg0: i32, %arg1: i32) -> (i32, i32) {
    %c0_i32 = arith.constant 0 : i32
    %c0_i32_0 = arith.constant 0 : i32
    return %arg1, %c0_i32 : i32, i32
  }
  func.func @transform_2(%arg0: i32, %arg1: i32) -> (i32, i32) {
    %c0_i32 = arith.constant 0 : i32
    %c0_i32_0 = arith.constant 0 : i32
    %c0_i32_1 = arith.constant 0 : i32
    return %c0_i32, %c0_i32_0 : i32, i32
  }
  func.func @transform_3(%arg0: i32, %arg1: i32) -> (i32, i32) {
    %c0_i32 = arith.constant 0 : i32
    %c0_i32_0 = arith.constant 0 : i32
    %c0_i32_1 = arith.constant 0 : i32
    return %c0_i32, %c0_i32_0 : i32, i32
  }
  func.func @transform_4(%arg0: i32, %arg1: i32) -> (i32, i32) {
    %c0_i32 = arith.constant 0 : i32
    %c0_i32_0 = arith.constant 0 : i32
    %c0_i32_1 = arith.constant 0 : i32
    return %c0_i32, %c0_i32_0 : i32, i32
  }
  func.func @transform_5(%arg0: i32, %arg1: i32) -> (i32, i32) {
    %c0_i32 = arith.constant 0 : i32
    %c0_i32_0 = arith.constant 0 : i32
    return %arg0, %c0_i32 : i32, i32
  }
}

</mosaic_0001>

<llo_original>
// kernel: tpu_custom_call.1
$region0: #{tpu_custom_call.1}
  #allocation0 [shape = 'u32[]', space=smem, size = 0x4, offset = 0x4, fixed_abs, tag = 'smem constant byte address 0x4 - core index']
  #allocation1 [shape = 'u32[144,128]{1,0:T(1,128)}', space=vmem, size = 0x12000, scoped, tag = 'internal scratch']
  #allocation2 [shape = 'f32[16,128]{1,0:T(8,128)}', space=vmem, size = 0x2000, scoped, tag = 'scratch operand']
  %s0 = inlined_call_operand.hbm [shape: bf16[16,128], index: 0, kind: input, shape index: {}]
  %s1 = inlined_call_operand.hbm [shape: bf16[128,128], index: 1, kind: input, shape index: {}]
  %s2 = inlined_call_operand.vmem [shape: f32[1,128], index: 2, kind: input, shape index: {}]
  %s3 = inlined_call_operand.hbm [shape: bf16[128,128], index: 3, kind: input, shape index: {}]
  %s4 = inlined_call_operand.vmem [shape: f32[1,128], index: 4, kind: input, shape index: {}]
  %s5 = inlined_call_operand.hbm [shape: f32[16,128], index: 5, kind: output, shape index: {}]
  %s6 = sld [smem:[#allocation0]]
  $region50: #{tpu_custom_call.1} parent=0
    _
  %s8 = ssub.s32 1, %s6
  %s9 = scalar_select 0, %s8, %s6
  $region1: #{tpu_custom_call.1} parent=0
    #allocation3 [shape = 'u8[4096]{0}', space=vmem, size = 0x1000, scoped, tag = 'input window, operand 0, single buffered']
    #allocation4 [shape = 's32[1]{0}', space=sflag, size = 0x4, scoped, tag = 'scoped memory for tpu_custom_call.1']
    #allocation5 [shape = 's32[1]{0}', space=sflag, size = 0x4, scoped, tag = 'scoped memory for tpu_custom_call.1']
    #allocation6 [shape = 'u8[32768]{0}', space=vmem, size = 0x8000, scoped, tag = 'input window, operand 1, single buffered']
    #allocation7 [shape = 's32[1]{0}', space=sflag, size = 0x4, scoped, tag = 'scoped memory for tpu_custom_call.1']
    #allocation8 [shape = 'u8[32768]{0}', space=vmem, size = 0x8000, scoped, tag = 'input window, operand 3, single buffered']
    #allocation9 [shape = 'u8[8192]{0}', space=vmem, size = 0x2000, scoped, tag = 'output window, operand 0, single buffered']
    %10 = vsyncpa [#allocation4], 0
    %11 = vsyncpa [#allocation7], 0
    %12 = vsyncpa [#allocation5], 0
    // Predicated region
    $region2: #{tpu_custom_call.1} parent=1 // pred_check
      _
    $region3: #{tpu_custom_call.1} parent=1 // pred_check_branch
      %14 = sbr.rel (0) target = $region5
    $region4: #{tpu_custom_call.1} parent=1 // pred_region
      %s16 = ssub.s32 128, 128
      %17 = vsyncadd [#allocation4], %s16
      %s18 = sshll.u32 [#allocation3], 4
      %s19 = int_to_ptr.vmem [resolvable:$true] %s18
      %24 = dma.hbm_to_vmem [thread:$0]  %s0, 128, %s19, [#allocation4], 64, 64, 4
    $region5: #{tpu_custom_call.1} parent=1 // pred_fallthru
      _
    // Predicated region
    $region6: #{tpu_custom_call.1} parent=1 // pred_check
      _
    $region7: #{tpu_custom_call.1} parent=1 // pred_check_branch
      %26 = sbr.rel (0) target = $region9
    $region8: #{tpu_custom_call.1} parent=1 // pred_region
      %s28 = ssub.s32 1024, 1024
      %29 = vsyncadd [#allocation7], %s28
      %s30 = sshll.u32 [#allocation6], 4
      %s31 = int_to_ptr.vmem [resolvable:$true] %s30
      %36 = dma.hbm_to_vmem [thread:$0]  %s1, 1024, %s31, [#allocation7], 64, 64, 4
    $region9: #{tpu_custom_call.1} parent=1 // pred_fallthru
      _
    // Predicated region
    $region10: #{tpu_custom_call.1} parent=1 // pred_check
      _
    $region11: #{tpu_custom_call.1} parent=1 // pred_check_branch
      %38 = sbr.rel (0) target = $region13
    $region12: #{tpu_custom_call.1} parent=1 // pred_region
      _
    $region13: #{tpu_custom_call.1} parent=1 // pred_fallthru
      _
    // Predicated region
    $region14: #{tpu_custom_call.1} parent=1 // pred_check
      _
    $region15: #{tpu_custom_call.1} parent=1 // pred_check_branch
      %40 = sbr.rel (0) target = $region17
    $region16: #{tpu_custom_call.1} parent=1 // pred_region
      %s42 = ssub.s32 1024, 1024
      %43 = vsyncadd [#allocation7], %s42
      %s44 = sshll.u32 [#allocation8], 4
      %s45 = int_to_ptr.vmem [resolvable:$true] %s44
      %50 = dma.hbm_to_vmem [thread:$0]  %s3, 1024, %s45, [#allocation7], 64, 64, 4
    $region17: #{tpu_custom_call.1} parent=1 // pred_fallthru
      _
    // Predicated region
    $region18: #{tpu_custom_call.1} parent=1 // pred_check
      _
    $region19: #{tpu_custom_call.1} parent=1 // pred_check_branch
      %52 = sbr.rel (0) target = $region21
    $region20: #{tpu_custom_call.1} parent=1 // pred_region
      _
    $region21: #{tpu_custom_call.1} parent=1 // pred_fallthru
      _
    // Predicated region
    $region22: #{tpu_custom_call.1} parent=1 // pred_check
      _
    $region23: #{tpu_custom_call.1} parent=1 // pred_check_branch
      %54 = sbr.rel (0) target = $region25
    $region24: #{tpu_custom_call.1} parent=1 // pred_region
      %55 = dma.done [#allocation4], 128
    $region25: #{tpu_custom_call.1} parent=1 // pred_fallthru
      _
    // Predicated region
    $region26: #{tpu_custom_call.1} parent=1 // pred_check
      _
    $region27: #{tpu_custom_call.1} parent=1 // pred_check_branch
      %57 = sbr.rel (0) target = $region29
    $region28: #{tpu_custom_call.1} parent=1 // pred_region
      %58 = dma.done [#allocation7], 1024
    $region29: #{tpu_custom_call.1} parent=1 // pred_fallthru
      _
    // Predicated region
    $region30: #{tpu_custom_call.1} parent=1 // pred_check
      _
    $region31: #{tpu_custom_call.1} parent=1 // pred_check_branch
      %60 = sbr.rel (0) target = $region33
    $region32: #{tpu_custom_call.1} parent=1 // pred_region
      %61 = dma.done [#allocation7], 1024
    $region33: #{tpu_custom_call.1} parent=1 // pred_fallthru
      _
    %p63 = scmp.eq.s32.totalorder 0, 0
    // Predicated region
    $region34: #{tpu_custom_call.1} parent=1 // pred_check
      %p64 = pneg %p63
    $region35: #{tpu_custom_call.1} parent=1 // pred_check_branch
      %66 = sbr.rel (%p64) target = $region37
    $region36: #{tpu_custom_call.1} parent=1 // pred_region
      %67 = vst [vmem:[#allocation2] sm:$0xff] 0.0
      %68 = vst [vmem:[#allocation2 + $0x8] sm:$0xff] 0.0
    $region37: #{tpu_custom_call.1} parent=1 // pred_fallthru
      _
    %v69 = vld [vmem:[#allocation2] sm:$0xff]
    %v70 = vld [vmem:[#allocation2 + $0x8] sm:$0xff]
    %v71 = vld [vmem:[#allocation3] sm:$0xf]
    %v72 = vld [vmem:[#allocation3 + $0x4] sm:$0xf]
    %v73 = vld [vmem:[#allocation6] sm:$0xf]
    %v74 = vld [vmem:[#allocation6 + $0x4] sm:$0xf]
    %v75 = vld [vmem:[#allocation6 + $0x8] sm:$0xf]
    %v76 = vld [vmem:[#allocation6 + $0xc] sm:$0xf]
    %v77 = vld [vmem:[#allocation6 + $0x10] sm:$0xf]
    %v78 = vld [vmem:[#allocation6 + $0x14] sm:$0xf]
    %v79 = vld [vmem:[#allocation6 + $0x18] sm:$0xf]
    %v80 = vld [vmem:[#allocation6 + $0x1c] sm:$0xf]
    %v81 = vld [vmem:[#allocation6 + $0x20] sm:$0xf]
    %v82 = vld [vmem:[#allocation6 + $0x24] sm:$0xf]
    %v83 = vld [vmem:[#allocation6 + $0x28] sm:$0xf]
    %v84 = vld [vmem:[#allocation6 + $0x2c] sm:$0xf]
    %v85 = vld [vmem:[#allocation6 + $0x30] sm:$0xf]
    %v86 = vld [vmem:[#allocation6 + $0x34] sm:$0xf]
    %v87 = vld [vmem:[#allocation6 + $0x38] sm:$0xf]
    %v88 = vld [vmem:[#allocation6 + $0x3c] sm:$0xf]
    %v91 = vunpack.c.l.b16 %v71
    %v92 = vunpack.c.l.b16 %v72
    %v93 = vpack.c.b16 %v92, %v91
    %v111 = vunpack.c.l.b16 %v73
    %v112 = vunpack.c.l.b16 %v74
    %v113 = vunpack.c.l.b16 %v75
    %v114 = vunpack.c.l.b16 %v76
    %v115 = vunpack.c.l.b16 %v77
    %v116 = vunpack.c.l.b16 %v78
    %v117 = vunpack.c.l.b16 %v79
    %v118 = vunpack.c.l.b16 %v80
    %v119 = vunpack.c.l.b16 %v81
    %v120 = vunpack.c.l.b16 %v82
    %v121 = vunpack.c.l.b16 %v83
    %v122 = vunpack.c.l.b16 %v84
    %v123 = vunpack.c.l.b16 %v85
    %v124 = vunpack.c.l.b16 %v86
    %v125 = vunpack.c.l.b16 %v87
    %v126 = vunpack.c.l.b16 %v88
    %v127 = vpack.c.b16 %v112, %v111
    %v128 = vpack.c.b16 %v114, %v113
    %v129 = vpack.c.b16 %v116, %v115
    %v130 = vpack.c.b16 %v118, %v117
    %v131 = vpack.c.b16 %v120, %v119
    %v132 = vpack.c.b16 %v122, %v121
    %v133 = vpack.c.b16 %v124, %v123
    %v134 = vpack.c.b16 %v126, %v125
    %143 = vmatprep.subr.bf16.mxu0 0
    %144 = vmatpush1.bf16.msra.mxu0 %v127
    %145 = vmatprep.subr.bf16.mxu0 0
    %146 = vmatpush1.bf16.msra.mxu0 %v128
    %147 = vmatprep.subr.bf16.mxu0 0
    %148 = vmatpush1.bf16.msra.mxu0 %v129
    %149 = vmatprep.subr.bf16.mxu0 0
    %150 = vmatpush1.bf16.msra.mxu0 %v130
    %151 = vmatprep.subr.bf16.mxu0 0
    %152 = vmatpush1.bf16.msra.mxu0 %v131
    %153 = vmatprep.subr.bf16.mxu0 0
    %154 = vmatpush1.bf16.msra.mxu0 %v132
    %155 = vmatprep.subr.bf16.mxu0 0
    %156 = vmatpush1.bf16.msra.mxu0 %v133
    %157 = vmatprep.subr.bf16.mxu0 0
    %158 = vmatpush1.bf16.msra.mxu0 %v134
    %159 = vmatprep.subr.bf16.mxu0 0
    %160 = vmatpush1.bf16.msra.mxu0 0
    %161 = vmatprep.subr.bf16.mxu0 0
    %162 = vmatpush1.bf16.msra.mxu0 0
    %163 = vmatprep.subr.bf16.mxu0 0
    %164 = vmatpush1.bf16.msra.mxu0 0
    %165 = vmatprep.subr.bf16.mxu0 0
    %166 = vmatpush1.bf16.msra.mxu0 0
    %167 = vmatprep.subr.bf16.mxu0 0
    %168 = vmatpush1.bf16.msra.mxu0 0
    %169 = vmatprep.subr.bf16.mxu0 0
    %170 = vmatpush1.bf16.msra.mxu0 0
    %171 = vmatprep.subr.bf16.mxu0 0
    %172 = vmatpush1.bf16.msra.mxu0 0
    %173 = vmatprep.subr.bf16.mxu0 0
    %174 = vmatpush1.bf16.msra.mxu0 0
    %175 = vmatprep.mubr.bf16.mxu0 0
    %176 = vmatmul.mubr.bf16.gmra.mrb[0].mxu0 %v93
    %v177 = vpop.f32.mrb[0].mxu0
    %v178 = vadd.f32 0.0, %v177
    %v179 = vpop.f32.mrb[0].mxu0
    %v180 = vpop.f32.mrb[0].mxu0
    %v181 = vadd.f32 0.0, %v180
    %v182 = vpop.f32.mrb[0].mxu0
    %183 = vdwg.mxu0
    %v184 = vadd.f32 %v69, %v178
    %v185 = vadd.f32 %v70, %v181
    %186 = vst [vmem:[#allocation2] sm:$0xff] %v184
    %187 = vst [vmem:[#allocation2 + $0x8] sm:$0xff] %v185
    // Predicated region
    $region38: #{tpu_custom_call.1} parent=1 // pred_check
      %p188 = pneg %p63
    $region39: #{tpu_custom_call.1} parent=1 // pred_check_branch
      %190 = sbr.rel (%p188) target = $region41
    $region40: #{tpu_custom_call.1} parent=1 // pred_region
      %v191 = vld [vmem:[#allocation2] sm:$0xff]
      %v192 = vld [vmem:[#allocation2 + $0x8] sm:$0xff]
      %v193 = vld [vmem:[%s2] sm:$0x1]
      %v195 = vlaneseq
      %v196 = vshrl.u32 %v195, 7
      %v197 = vsub.s32 0, %v196
      %v198 = vrot.slane %v193, %v197
      %v200 = vadd.f32 %v191, %v198
      %v201 = vadd.f32 %v192, %v198
      %v202 = vmax.f32 %v200, 0.0
      %v203 = vmax.f32 %v201, 0.0
      %v204 = vpack.c.bf16 %v203, %v202
      %v205 = vld [vmem:[#allocation8] sm:$0xf]
      %v206 = vld [vmem:[#allocation8 + $0x4] sm:$0xf]
      %v207 = vld [vmem:[#allocation8 + $0x8] sm:$0xf]
      %v208 = vld [vmem:[#allocation8 + $0xc] sm:$0xf]
      %v209 = vld [vmem:[#allocation8 + $0x10] sm:$0xf]
      %v210 = vld [vmem:[#allocation8 + $0x14] sm:$0xf]
      %v211 = vld [vmem:[#allocation8 + $0x18] sm:$0xf]
      %v212 = vld [vmem:[#allocation8 + $0x1c] sm:$0xf]
      %v213 = vld [vmem:[#allocation8 + $0x20] sm:$0xf]
      %v214 = vld [vmem:[#allocation8 + $0x24] sm:$0xf]
      %v215 = vld [vmem:[#allocation8 + $0x28] sm:$0xf]
      %v216 = vld [vmem:[#allocation8 + $0x2c] sm:$0xf]
      %v217 = vld [vmem:[#allocation8 + $0x30] sm:$0xf]
      %v218 = vld [vmem:[#allocation8 + $0x34] sm:$0xf]
      %v219 = vld [vmem:[#allocation8 + $0x38] sm:$0xf]
      %v220 = vld [vmem:[#allocation8 + $0x3c] sm:$0xf]
      %v221 = vld [vmem:[%s4] sm:$0x1]
      %v223 = vlaneseq
      %v224 = vshrl.u32 %v223, 7
      %v225 = vsub.s32 0, %v224
      %v226 = vrot.slane %v221, %v225
      %v244 = vunpack.c.l.b16 %v205
      %v245 = vunpack.c.l.b16 %v206
      %v246 = vunpack.c.l.b16 %v207
      %v247 = vunpack.c.l.b16 %v208
      %v248 = vunpack.c.l.b16 %v209
      %v249 = vunpack.c.l.b16 %v210
      %v250 = vunpack.c.l.b16 %v211
      %v251 = vunpack.c.l.b16 %v212
      %v252 = vunpack.c.l.b16 %v213
      %v253 = vunpack.c.l.b16 %v214
      %v254 = vunpack.c.l.b16 %v215
      %v255 = vunpack.c.l.b16 %v216
      %v256 = vunpack.c.l.b16 %v217
      %v257 = vunpack.c.l.b16 %v218
      %v258 = vunpack.c.l.b16 %v219
      %v259 = vunpack.c.l.b16 %v220
      %v260 = vpack.c.b16 %v245, %v244
      %v261 = vpack.c.b16 %v247, %v246
      %v262 = vpack.c.b16 %v249, %v248
      %v263 = vpack.c.b16 %v251, %v250
      %v264 = vpack.c.b16 %v253, %v252
      %v265 = vpack.c.b16 %v255, %v254
      %v266 = vpack.c.b16 %v257, %v256
      %v267 = vpack.c.b16 %v259, %v258
      %276 = vmatprep.subr.bf16.mxu0 0
      %277 = vmatpush1.bf16.msra.mxu0 %v260
      %278 = vmatprep.subr.bf16.mxu0 0
      %279 = vmatpush1.bf16.msra.mxu0 %v261
      %280 = vmatprep.subr.bf16.mxu0 0
      %281 = vmatpush1.bf16.msra.mxu0 %v262
      %282 = vmatprep.subr.bf16.mxu0 0
      %283 = vmatpush1.bf16.msra.mxu0 %v263
      %284 = vmatprep.subr.bf16.mxu0 0
      %285 = vmatpush1.bf16.msra.mxu0 %v264
      %286 = vmatprep.subr.bf16.mxu0 0
      %287 = vmatpush1.bf16.msra.mxu0 %v265
      %288 = vmatprep.subr.bf16.mxu0 0
      %289 = vmatpush1.bf16.msra.mxu0 %v266
      %290 = vmatprep.subr.bf16.mxu0 0
      %291 = vmatpush1.bf16.msra.mxu0 %v267
      %292 = vmatprep.subr.bf16.mxu0 0
      %293 = vmatpush1.bf16.msra.mxu0 0
      %294 = vmatprep.subr.bf16.mxu0 0
      %295 = vmatpush1.bf16.msra.mxu0 0
      %296 = vmatprep.subr.bf16.mxu0 0
      %297 = vmatpush1.bf16.msra.mxu0 0
      %298 = vmatprep.subr.bf16.mxu0 0
      %299 = vmatpush1.bf16.msra.mxu0 0
      %300 = vmatprep.subr.bf16.mxu0 0
      %301 = vmatpush1.bf16.msra.mxu0 0
      %302 = vmatprep.subr.bf16.mxu0 0
      %303 = vmatpush1.bf16.msra.mxu0 0
      %304 = vmatprep.subr.bf16.mxu0 0
      %305 = vmatpush1.bf16.msra.mxu0 0
      %306 = vmatprep.subr.bf16.mxu0 0
      %307 = vmatpush1.bf16.msra.mxu0 0
      %308 = vmatprep.mubr.bf16.mxu0 0
      %309 = vmatmul.mubr.bf16.gmra.mrb[0].mxu0 %v204
      %v310 = vpop.f32.mrb[0].mxu0
      %v311 = vadd.f32 %v226, %v310
      %v312 = vpop.f32.mrb[0].mxu0
      %v313 = vpop.f32.mrb[0].mxu0
      %v314 = vadd.f32 %v226, %v313
      %v315 = vpop.f32.mrb[0].mxu0
      %316 = vdwg.mxu0
      %v317 = vsub.f32 0.0, %v311
      %v318 = vsub.f32 0.0, %v314
      %v319 = vmul.f32 %v317, 1.442695
      %v320 = vpow.pop %v319
      %v321 = vmul.f32 %v318, 1.442695
      %v322 = vpow.pop %v321
      %v323 = vadd.f32 %v320, 1.0
      %v324 = vadd.f32 %v322, 1.0
      %v325 = vrcp.pop %v323
      %v326 = vrcp.pop %v324
      %327 = vst [vmem:[#allocation9] sm:$0xff] %v325
      %328 = vst [vmem:[#allocation9 + $0x8] sm:$0xff] %v326
    $region41: #{tpu_custom_call.1} parent=1 // pred_fallthru
      _
    // Predicated region
    $region42: #{tpu_custom_call.1} parent=1 // pred_check
      _
    $region43: #{tpu_custom_call.1} parent=1 // pred_check_branch
      %330 = sbr.rel (0) target = $region45
    $region44: #{tpu_custom_call.1} parent=1 // pred_region
      %s332 = ssub.s32 256, 256
      %333 = vsyncadd [#allocation5], %s332
      %s334 = sshll.u32 [#allocation9], 4
      %s335 = int_to_ptr.vmem [resolvable:$true] %s334
      %340 = dma.vmem_to_hbm [thread:$0]  %s335, 256, %s5, [#allocation5], 128, 128, 8
    $region45: #{tpu_custom_call.1} parent=1 // pred_fallthru
      _
    // Predicated region
    $region46: #{tpu_custom_call.1} parent=1 // pred_check
      _
    $region47: #{tpu_custom_call.1} parent=1 // pred_check_branch
      %342 = sbr.rel (0) target = $region49
    $region48: #{tpu_custom_call.1} parent=1 // pred_region
      %343 = dma.done [#allocation5], 256
    $region49: #{tpu_custom_call.1} parent=1 // pred_fallthru
      _
    %344 = vsyncpa [#allocation4], 1
    %345 = vsyncpa [#allocation7], 1
    %346 = vsyncpa [#allocation5], 1

</llo_original>
